<compile_context>
chip_gen: v5e
topology: v5e:2x2
jax: 0.10.0
libtpu: 0.0.40
codegen_flags: <defaults>
</compile_context>

<pallas_src>
import jax
import jax.numpy as jnp
from jax import lax
from jax.experimental import pallas as pl
from jax.experimental.pallas import tpu as pltpu


def _round_up(x, m):
    return ((x + m - 1) // m) * m


# Conservative per-step live-VMEM budget (double-buffered blocks). Fits every
# generation once vmem_limit_bytes is raised, with headroom under v7x's 64 MiB
# physical VMEM.
_VMEM_BUDGET = 24 * 1024 * 1024
_VMEM_LIMIT = 40 * 1024 * 1024


def _step_bytes(tm, tn, tk):
    # 2x double-buffered x / w tiles + 2x buffered output tile + bias row (f32).
    return 4 * (2 * tm * tk + 2 * tk * tn + 2 * tm * tn + tn)


def _pick_tm(batch, tn, tk, budget=_VMEM_BUDGET):
    """Largest M tile (multiple of 8, capped) fitting the VMEM budget.

    Prefers covering the whole padded batch so the weight is read from HBM
    exactly once (grid order (i, j, k) re-streams the weight per M block)."""
    full = min(_round_up(batch, 8), 4096)
    for tm in (full, 2048, 1024, 512, 256, 128, 64, 32, 16, 8):
        if tm <= full and _step_bytes(tm, tn, tk) <= budget:
            return tm
    return 8


def _choose_n(out_features):
    n_pad = _round_up(out_features, 128)
    if n_pad <= 512:
        return n_pad, n_pad                      # single N block
    for tn in (512, 256, 128):
        if n_pad % tn == 0:
            return n_pad, tn
    return n_pad, 128


def _choose_k(in_features):
    k_pad = _round_up(in_features, 128)
    if k_pad <= 1024:
        return k_pad, k_pad                      # no K grid axis at all
    for tk in (1024, 512, 256, 128):
        if k_pad % tk == 0:
            return k_pad, tk
    return k_pad, 128


# ---------------------------------------------------------------------------
# Kernels
# ---------------------------------------------------------------------------
def _k1_kernel(x_ref, w_ref, b_ref, o_ref):
    # IN == 1: rank-1 update.  Pure VPU broadcast multiply-add; skipping the
    # MXU avoids systolic fill/drain latency for a K=1 "matmul".
    o_ref[...] = (x_ref[...] * w_ref[...] + b_ref[...]).astype(o_ref.dtype)


def _linear_2d_kernel(x_ref, w_ref, b_ref, o_ref):
    # Whole contraction in one block: straight (M,K)x(K,N) MXU matmul + bias.
    y = jnp.dot(x_ref[...], w_ref[...], preferred_element_type=jnp.float32)
    o_ref[...] = (y + b_ref[...]).astype(o_ref.dtype)


def _linear_3d_kernel(x_ref, w_ref, b_ref, o_ref):
    # K tiled: accumulate directly into the resident f32 output block
    # (no acc scratch); bias folded into the final K step.
    k = pl.program_id(2)

    @pl.when(k == 0)
    def _():
        o_ref[...] = jnp.zeros_like(o_ref)

    o_ref[...] += jnp.dot(x_ref[...], w_ref[...],
                          preferred_element_type=jnp.float32)

    @pl.when(k == pl.num_programs(2) - 1)
    def _():
        o_ref[...] += b_ref[...]


# ---------------------------------------------------------------------------
# Init (one-time parameter prep) + forward
# ---------------------------------------------------------------------------
def init_net_params(weight, bias):
    """One-time prep for Net.fc = nn.Linear(IN, OUT) with PyTorch (OUT, IN)
    weight layout.  Pads OUT -> N_pad / IN -> K_pad and pre-transposes the
    weight to (K_pad, N_pad) so the per-call forward never pads or transposes
    the weight again."""
    out_f, in_f = weight.shape
    n_pad, tn = _choose_n(out_f)
    b_p = jnp.pad(bias.reshape(1, out_f), ((0, 0), (0, n_pad - out_f)))
    if in_f == 1:
        # (OUT, 1) -> (1, OUT): pure reshape of contiguous data.
        w_p = jnp.pad(weight.reshape(1, out_f), ((0, 0), (0, n_pad - out_f)))
        k_pad, tk = 1, 1
    else:
        k_pad, tk = _choose_k(in_f)
        w_p = jnp.asarray(
            jnp.pad(weight, ((0, n_pad - out_f), (0, k_pad - in_f))).T)
    return {
        "w": w_p, "b": b_p,
        "out_features": out_f, "in_features": in_f,
        "n_pad": n_pad, "k_pad": k_pad, "tn": tn, "tk": tk,
    }


def net_forward(params, x):
    """Forward of Net: fc(x) = x @ weight.T + bias.

    x: (B, IN) float32; params from init_net_params; returns (B, OUT) float32.
    """
    batch, in_f = x.shape
    assert in_f == params["in_features"]
    out_f, n_pad = params["out_features"], params["n_pad"]
    k_pad, tn, tk = params["k_pad"], params["tn"], params["tk"]
    w_p, b_p = params["w"], params["b"]

    if in_f == 1:
        # VPU-only rank-1 path, tiled over the batch only.
        tm = _pick_tm(batch, n_pad, 1)
        m_pad = _round_up(batch, tm)
        x_p = jnp.pad(x, ((0, m_pad - batch), (0, 0)))
        out = pl.pallas_call(
            _k1_kernel,
            out_shape=jax.ShapeDtypeStruct((m_pad, n_pad), x.dtype),
            grid_spec=pltpu.PrefetchScalarGridSpec(
                num_scalar_prefetch=0,
                grid=(m_pad // tm,),
                in_specs=[
                    pl.BlockSpec((tm, 1), lambda i: (i, 0)),
                    pl.BlockSpec((1, n_pad), lambda i: (0, 0)),
                    pl.BlockSpec((1, n_pad), lambda i: (0, 0)),
                ],
                out_specs=pl.BlockSpec((tm, n_pad), lambda i: (i, 0)),
            ),
            compiler_params=pltpu.CompilerParams(
                dimension_semantics=("parallel",),
                vmem_limit_bytes=_VMEM_LIMIT,
            ),
        )(x_p, w_p, b_p)
        return out[:batch, :out_f]

    tm = _pick_tm(batch, tn, tk)
    m_pad = _round_up(batch, tm)
    x_p = jnp.pad(x, ((0, m_pad - batch), (0, k_pad - in_f)))

    if tk == k_pad:
        # Whole contraction in one block: 2-D grid, no accumulator, no pl.when.
        out = pl.pallas_call(
            _linear_2d_kernel,
            out_shape=jax.ShapeDtypeStruct((m_pad, n_pad), x.dtype),
            grid_spec=pltpu.PrefetchScalarGridSpec(
                num_scalar_prefetch=0,
                grid=(m_pad // tm, n_pad // tn),
                in_specs=[
                    pl.BlockSpec((tm, k_pad), lambda i, j: (i, 0)),
                    pl.BlockSpec((k_pad, tn), lambda i, j: (0, j)),
                    pl.BlockSpec((1, tn), lambda i, j: (0, j)),
                ],
                out_specs=pl.BlockSpec((tm, tn), lambda i, j: (i, j)),
            ),
            compiler_params=pltpu.CompilerParams(
                dimension_semantics=("parallel", "parallel"),
                vmem_limit_bytes=_VMEM_LIMIT,
            ),
        )(x_p, w_p, b_p)
        return out[:batch, :out_f]

    # K tiled: 3-D grid, accumulate directly into the resident f32 output.
    out = pl.pallas_call(
        _linear_3d_kernel,
        out_shape=jax.ShapeDtypeStruct((m_pad, n_pad), jnp.float32),
        grid_spec=pltpu.PrefetchScalarGridSpec(
            num_scalar_prefetch=0,
            grid=(m_pad // tm, n_pad // tn, k_pad // tk),
            in_specs=[
                pl.BlockSpec((tm, tk), lambda i, j, k: (i, k)),
                pl.BlockSpec((tk, tn), lambda i, j, k: (k, j)),
                pl.BlockSpec((1, tn), lambda i, j, k: (0, j)),
            ],
            out_specs=pl.BlockSpec((tm, tn), lambda i, j, k: (i, j)),
        ),
        compiler_params=pltpu.CompilerParams(
            dimension_semantics=("parallel", "parallel", "arbitrary"),
            vmem_limit_bytes=_VMEM_LIMIT,
        ),
    )(x_p, w_p, b_p)
    return out[:batch, :out_f].astype(x.dtype)


if __name__ == "__main__":
    # --- Primary test: shapes implied by the PyTorch module -----------------
    n_input_node = 1
    n_output_nodes = 3
    batch = 2

    key = jax.random.PRNGKey(0)
    kx, kw, kb = jax.random.split(key, 3)

    bound = 1.0 / (n_input_node ** 0.5)
    weight = jax.random.uniform(
        kw, (n_output_nodes, n_input_node), jnp.float32, -bound, bound)
    bias = jax.random.uniform(
        kb, (n_output_nodes,), jnp.float32, -bound, bound)
    x = jax.random.uniform(kx, (batch, n_input_node), jnp.float32)

    params = init_net_params(weight, bias)
    out = jax.block_until_ready(net_forward(params, x))
    ref = x @ weight.T + bias
    assert out.shape == (batch, n_output_nodes)
    assert jnp.allclose(out, ref, atol=1e-5, rtol=1e-5)

    # --- Secondary test: 2-D grid path (full-K block), non-divisible shapes -
    B2, IN2, OUT2 = 192, 640, 384
    k2x, k2w, k2b = jax.random.split(jax.random.PRNGKey(1), 3)
    x2 = jax.random.normal(k2x, (B2, IN2), jnp.float32) / (IN2 ** 0.5)
    w2 = jax.random.normal(k2w, (OUT2, IN2), jnp.float32) / (IN2 ** 0.5)
    b2 = jax.random.normal(k2b, (OUT2,), jnp.float32)
    p2 = init_net_params(w2, b2)
    out2 = jax.block_until_ready(net_forward(p2, x2))
    ref2 = jnp.dot(x2, w2.T, precision=lax.Precision.HIGHEST) + b2
    assert out2.shape == (B2, OUT2)
    assert jnp.allclose(out2, ref2, atol=2e-3, rtol=2e-3)

    # --- Third test: 3-D grid path (K tiled, accumulate into output) --------
    B3, IN3, OUT3 = 64, 1536, 256
    k3x, k3w, k3b = jax.random.split(jax.random.PRNGKey(2), 3)
    x3 = jax.random.normal(k3x, (B3, IN3), jnp.float32) / (IN3 ** 0.5)
    w3 = jax.random.normal(k3w, (OUT3, IN3), jnp.float32) / (IN3 ** 0.5)
    b3 = jax.random.normal(k3b, (OUT3,), jnp.float32)
    p3 = init_net_params(w3, b3)
    out3 = jax.block_until_ready(net_forward(p3, x3))
    ref3 = jnp.dot(x3, w3.T, precision=lax.Precision.HIGHEST) + b3
    assert out3.shape == (B3, OUT3)
    assert jnp.allclose(out3, ref3, atol=2e-3, rtol=2e-3)

    print("KERNEL_OK")
</pallas_src>

<mosaic_0001>
module attributes {stable_mosaic.version = 11 : i64} {
  func.func @_k1_kernel(%arg0: i32, %arg1: memref<8x1xf32, #tpu.memory_space<vmem>>, %arg2: memref<1x128xf32, #tpu.memory_space<vmem>>, %arg3: memref<1x128xf32, #tpu.memory_space<vmem>>, %arg4: memref<8x128xf32, #tpu.memory_space<vmem>>) attributes {dimension_semantics = [#tpu.dimension_semantics<parallel>], iteration_bounds = array<i64: 1>, scalar_prefetch = 0 : i64, scratch_operands = 0 : i64, tpu.core_type = #tpu.core_type<tc>, window_params = [{transform_indices = @transform_0, window_bounds = array<i64: 8, 1>}, {pipeline_mode = #tpu.pipeline_mode<synchronous>, transform_indices = @transform_1, window_bounds = array<i64: 1, 128>}, {pipeline_mode = #tpu.pipeline_mode<synchronous>, transform_indices = @transform_2, window_bounds = array<i64: 1, 128>}, {transform_indices = @transform_3, window_bounds = array<i64: 8, 128>}]} {
    %c0 = arith.constant 0 : index
    %c0_0 = arith.constant 0 : index
    %0 = vector.load %arg1[%c0, %c0_0] : memref<8x1xf32, #tpu.memory_space<vmem>>, vector<8x1xf32>
    %c0_1 = arith.constant 0 : index
    %c0_2 = arith.constant 0 : index
    %1 = vector.load %arg2[%c0_1, %c0_2] : memref<1x128xf32, #tpu.memory_space<vmem>>, vector<1x128xf32>
    %2 = vector.broadcast %0 : vector<8x1xf32> to vector<8x128xf32>
    %3 = vector.broadcast %1 : vector<1x128xf32> to vector<8x128xf32>
    %4 = arith.mulf %2, %3 : vector<8x128xf32>
    %c0_3 = arith.constant 0 : index
    %c0_4 = arith.constant 0 : index
    %5 = vector.load %arg3[%c0_3, %c0_4] : memref<1x128xf32, #tpu.memory_space<vmem>>, vector<1x128xf32>
    %6 = vector.broadcast %5 : vector<1x128xf32> to vector<8x128xf32>
    %7 = arith.addf %4, %6 : vector<8x128xf32>
    %c0_5 = arith.constant 0 : index
    %c0_6 = arith.constant 0 : index
    %8 = vector.load %arg4[%c0_5, %c0_6] : memref<8x128xf32, #tpu.memory_space<vmem>>, vector<8x128xf32>
    tpu.vector_store %arg4[%c0_5, %c0_6], %7 {strides = array<i32>} : memref<8x128xf32, #tpu.memory_space<vmem>>, vector<8x128xf32>,
    return
  }
  func.func @transform_0(%arg0: i32) -> (i32, i32) {
    %c0_i32 = arith.constant 0 : i32
    %c0_i32_0 = arith.constant 0 : i32
    return %arg0, %c0_i32 : i32, i32
  }
  func.func @transform_1(%arg0: i32) -> (i32, i32) {
    %c0_i32 = arith.constant 0 : i32
    %c0_i32_0 = arith.constant 0 : i32
    %c0_i32_1 = arith.constant 0 : i32
    return %c0_i32, %c0_i32_0 : i32, i32
  }
  func.func @transform_2(%arg0: i32) -> (i32, i32) {
    %c0_i32 = arith.constant 0 : i32
    %c0_i32_0 = arith.constant 0 : i32
    %c0_i32_1 = arith.constant 0 : i32
    return %c0_i32, %c0_i32_0 : i32, i32
  }
  func.func @transform_3(%arg0: i32) -> (i32, i32) {
    %c0_i32 = arith.constant 0 : i32
    %c0_i32_0 = arith.constant 0 : i32
    return %arg0, %c0_i32 : i32, i32
  }
}

</mosaic_0001>

<llo_original>
// kernel: tpu_custom_call.1
$region0: #{tpu_custom_call.1}
  #allocation0 [shape = 'u32[]', space=smem, size = 0x4, offset = 0x4, fixed_abs, tag = 'smem constant byte address 0x4 - core index']
  #allocation1 [shape = 'u32[72,128]{1,0:T(1,128)}', space=vmem, size = 0x9000, scoped, tag = 'internal scratch']
  %s0 = inlined_call_operand.vmem [shape: f32[8,1], index: 0, kind: input, shape index: {}]
  %s1 = inlined_call_operand.vmem [shape: f32[1,128], index: 1, kind: input, shape index: {}]
  %s2 = inlined_call_operand.vmem [shape: f32[1,128], index: 2, kind: input, shape index: {}]
  %s3 = inlined_call_operand.hbm [shape: f32[8,128], index: 3, kind: output, shape index: {}]
  %s4 = sld [smem:[#allocation0]]
  $region22: #{tpu_custom_call.1} parent=0
    _
  %s6 = ssub.s32 1, %s4
  %s7 = scalar_select 0, %s6, %s4
  $region1: #{tpu_custom_call.1} parent=0
    #allocation2 [shape = 'u8[4096]{0}', space=vmem, size = 0x1000, scoped, tag = 'output window, operand 0, single buffered']
    #allocation3 [shape = 's32[1]{0}', space=sflag, size = 0x4, scoped, tag = 'scoped memory for tpu_custom_call.1']
    %8 = vsyncpa [#allocation3], 0
    // Predicated region
    $region2: #{tpu_custom_call.1} parent=1 // pred_check
      _
    $region3: #{tpu_custom_call.1} parent=1 // pred_check_branch
      %10 = sbr.rel (0) target = $region5
    $region4: #{tpu_custom_call.1} parent=1 // pred_region
      _
    $region5: #{tpu_custom_call.1} parent=1 // pred_fallthru
      _
    // Predicated region
    $region6: #{tpu_custom_call.1} parent=1 // pred_check
      _
    $region7: #{tpu_custom_call.1} parent=1 // pred_check_branch
      %12 = sbr.rel (0) target = $region9
    $region8: #{tpu_custom_call.1} parent=1 // pred_region
      _
    $region9: #{tpu_custom_call.1} parent=1 // pred_fallthru
      _
    // Predicated region
    $region10: #{tpu_custom_call.1} parent=1 // pred_check
      _
    $region11: #{tpu_custom_call.1} parent=1 // pred_check_branch
      %14 = sbr.rel (0) target = $region13
    $region12: #{tpu_custom_call.1} parent=1 // pred_region
      _
    $region13: #{tpu_custom_call.1} parent=1 // pred_fallthru
      _
    %v15 = vld [vmem:[%s0] sm:$0xff]
    %v16 = vld [vmem:[%s1] sm:$0x1]
    %18 = vset.pattern.permute.xlu0 0
    %19 = vperm.xlu0 %18, %v15
    %v20 = vpop.permute.xlu0 %19
    %v23 = vperm.slane %v16, 0
    %v25 = vmul.f32 %v20, %v23
    %v26 = vld [vmem:[%s2] sm:$0x1]
    %v28 = vperm.slane %v26, 0
    %v30 = vadd.f32 %v25, %v28
    %31 = vst [vmem:[#allocation2] sm:$0xff] %v30
    // Predicated region
    $region14: #{tpu_custom_call.1} parent=1 // pred_check
      _
    $region15: #{tpu_custom_call.1} parent=1 // pred_check_branch
      %33 = sbr.rel (0) target = $region17
    $region16: #{tpu_custom_call.1} parent=1 // pred_region
      %35 = vsyncadd [#allocation3], 0
      %s37 = sshll.u32 [#allocation2], 4
      %s38 = int_to_ptr.vmem [resolvable:$true] %s37
      %s39 = sshll.u32 %s3, 4
      %s40 = int_to_ptr.hbm [resolvable:$true] %s39
      %42 = dma.vmem_to_hbm [thread:$0]  %s38, 128, %s40, [#allocation3]
    $region17: #{tpu_custom_call.1} parent=1 // pred_fallthru
      _
    // Predicated region
    $region18: #{tpu_custom_call.1} parent=1 // pred_check
      _
    $region19: #{tpu_custom_call.1} parent=1 // pred_check_branch
      %44 = sbr.rel (0) target = $region21
    $region20: #{tpu_custom_call.1} parent=1 // pred_region
      %46 = dma.done [#allocation3], 128
    $region21: #{tpu_custom_call.1} parent=1 // pred_fallthru
      _
    %47 = vsyncpa [#allocation3], 1

</llo_original>
